<compile_context>
chip_gen: v7x
topology: tpu7x:2x2x1
jax: 0.10.0
libtpu: 0.0.40
codegen_flags: <defaults>
</compile_context>

<pallas_src>
import functools

import jax
import jax.numpy as jnp
from jax.experimental import pallas as pl
from jax.experimental.pallas import tpu as pltpu

NEG_INF_FILL = -10000000000.0  # matches torch masked_fill value


def _sdpa_kernel(*refs, inv_temp, has_mask, return_attn):
    if has_mask:
        q_ref, k_ref, v_ref, mask_ref = refs[:4]
        out_refs = refs[4:]
    else:
        q_ref, k_ref, v_ref = refs[:3]
        mask_ref = None
        out_refs = refs[3:]
    out_ref = out_refs[0]
    attn_ref = out_refs[1] if return_attn else None

    q = q_ref[...]                      # (TB, TQ, D)  native dtype
    k = k_ref[...]                      # (TB, Lk, D)
    v = v_ref[...]                      # (TB, Lk, Dv)

    # Fold the 1/temperature scale into q (touches TQ*D elements, not TQ*Lk).
    qs = q * jnp.asarray(inv_temp, dtype=q.dtype)

    # Batched QK^T: contract on the last dim of both operands -> no explicit
    # transpose of k; MXU accumulates in f32.
    s = jnp.einsum("bqd,bkd->bqk", qs, k, preferred_element_type=jnp.float32)

    if has_mask:
        m = mask_ref[...]               # (TB, TQ, Lk) int8, nonzero => masked
        s = jnp.where(m != 0, jnp.float32(NEG_INF_FILL), s)

    # Softmax over the key axis, math kept in f32.
    row_max = jnp.max(s, axis=-1, keepdims=True)
    e = jnp.exp(s - row_max)
    denom = jnp.sum(e, axis=-1, keepdims=True)
    p = e * pl.reciprocal(denom, approx=False)   # exact, keeps attn at 1e-5 tol

    # TODO(synk): torch.nn.Dropout(0.1) in train mode is not reproduced (RNG
    # semantics differ); treated as identity (eval-mode behaviour).

    # PV matmul in the value dtype (bf16 MXU path when inputs are bf16).
    out = jnp.einsum("bqk,bkd->bqd", p.astype(v.dtype), v,
                     preferred_element_type=jnp.float32)
    out_ref[...] = out.astype(out_ref.dtype)
    if return_attn:
        attn_ref[...] = p.astype(attn_ref.dtype)


def _pick_tq(lq, tq_max=512):
    """Largest query-tile that divides Lq, is a multiple of 16, and <= tq_max."""
    if lq <= tq_max:
        return lq
    for tq in range(tq_max, 15, -16):
        if lq % tq == 0:
            return tq
    return lq  # no nice divisor: fall back to the full query axis


def _pick_tb(b, per_batch_bytes, budget_bytes=8 << 20, tb_cap=1024):
    """How many batches to fold into one grid step (must divide B)."""
    tb = max(1, min(b, tb_cap, budget_bytes // max(per_batch_bytes, 1)))
    while b % tb != 0:
        tb -= 1
    return tb


def scaled_dot_product_attention(q, k, v, temperature, mask=None,
                                 return_attn=True):
    """Pallas equivalent of ScaledDotProductAttention.forward (dropout = identity)."""
    B, Lq, D = q.shape
    Bk, Lk, Dk = k.shape
    Bv, Lkv, Dv = v.shape
    assert (Bk, Dk) == (B, D) and (Bv, Lkv) == (B, Lk)
    if mask is not None:
        assert mask.shape == (B, Lq, Lk)
    inv_temp = 1.0 / float(temperature)

    itemsize = jnp.dtype(q.dtype).itemsize
    v_itemsize = jnp.dtype(v.dtype).itemsize

    # ---- tiling heuristics -------------------------------------------------
    TQ = _pick_tq(Lq)
    per_batch_bytes = (TQ * D + Lk * D) * itemsize \
        + Lk * Dv * v_itemsize + TQ * Dv * itemsize
    if return_attn:
        per_batch_bytes += TQ * Lk * itemsize
    if mask is not None:
        per_batch_bytes += TQ * Lk  # int8
    TB = _pick_tb(B, per_batch_bytes) if TQ == Lq else 1

    grid = (B // TB, Lq // TQ)

    # ---- specs -------------------------------------------------------------
    q_spec = pl.BlockSpec((TB, TQ, D), lambda b, qi: (b, qi, 0))
    k_spec = pl.BlockSpec((TB, Lk, D), lambda b, qi: (b, 0, 0))
    v_spec = pl.BlockSpec((TB, Lk, Dv), lambda b, qi: (b, 0, 0))
    out_spec = pl.BlockSpec((TB, TQ, Dv), lambda b, qi: (b, qi, 0))
    attn_spec = pl.BlockSpec((TB, TQ, Lk), lambda b, qi: (b, qi, 0))
    m_spec = pl.BlockSpec((TB, TQ, Lk), lambda b, qi: (b, qi, 0))

    in_specs = [q_spec, k_spec, v_spec]
    args = [q, k, v]
    if mask is not None:
        in_specs.append(m_spec)
        args.append(mask.astype(jnp.int8))

    if return_attn:
        out_shape = (jax.ShapeDtypeStruct((B, Lq, Dv), q.dtype),
                     jax.ShapeDtypeStruct((B, Lq, Lk), q.dtype))
        out_specs = (out_spec, attn_spec)
    else:
        out_shape = jax.ShapeDtypeStruct((B, Lq, Dv), q.dtype)
        out_specs = out_spec

    # ---- VMEM / cost hints ---------------------------------------------------
    block_bytes = TB * per_batch_bytes
    vmem_limit = int(min(max(2 * block_bytes + (2 << 20), 16 << 20), 64 << 20))

    bytes_accessed = (B * Lq * D + B * Lk * D) * itemsize \
        + B * Lk * Dv * v_itemsize + B * Lq * Dv * itemsize
    if return_attn:
        bytes_accessed += B * Lq * Lk * itemsize
    if mask is not None:
        bytes_accessed += B * Lq * Lk
    cost = pl.CostEstimate(flops=2 * B * Lq * Lk * (D + Dv),
                           transcendentals=B * Lq * Lk,
                           bytes_accessed=int(bytes_accessed))

    kernel = functools.partial(_sdpa_kernel, inv_temp=inv_temp,
                               has_mask=mask is not None,
                               return_attn=return_attn)

    return pl.pallas_call(
        kernel,
        out_shape=out_shape,
        grid_spec=pltpu.PrefetchScalarGridSpec(
            num_scalar_prefetch=0,
            grid=grid,
            in_specs=in_specs,
            out_specs=out_specs,
        ),
        compiler_params=pltpu.CompilerParams(
            dimension_semantics=("parallel", "parallel"),
            vmem_limit_bytes=vmem_limit),
        cost_estimate=cost,
    )(*args)


def _reference(q, k, v, temperature, mask=None):
    attn = jnp.einsum("bqd,bkd->bqk", q, k) / temperature
    if mask is not None:
        attn = jnp.where(mask, NEG_INF_FILL, attn)
    attn = jax.nn.softmax(attn, axis=2)
    out = jnp.einsum("bqk,bkd->bqd", attn, v)
    return out, attn


def _check(q, k, v, temperature, mask, tag):
    out, attn = scaled_dot_product_attention(q, k, v, temperature, mask=mask)
    out, attn = jax.block_until_ready((out, attn))
    ref_out, ref_attn = _reference(q, k, v, temperature, mask=mask)
    assert jnp.allclose(out, ref_out, atol=1e-4), f"output mismatch ({tag})"
    assert jnp.allclose(attn, ref_attn, atol=1e-5), f"attn mismatch ({tag})"
    # output-only path (attn writeback skipped)
    out_only = scaled_dot_product_attention(q, k, v, temperature, mask=mask,
                                            return_attn=False)
    out_only = jax.block_until_ready(out_only)
    assert jnp.allclose(out_only, ref_out, atol=1e-4), f"out-only mismatch ({tag})"


if __name__ == "__main__":
    key = jax.random.PRNGKey(0)
    kq, kk, kv, km, kq2, kk2, kv2, km2 = jax.random.split(key, 8)

    # --- small shapes (batch folding path: TB = B, single grid step) --------
    B, Lq, Lk, D, Dv = 2, 8, 8, 32, 32
    temperature = float(D) ** 0.5
    q = jax.random.normal(kq, (B, Lq, D), dtype=jnp.float32)
    k = jax.random.normal(kk, (B, Lk, D), dtype=jnp.float32)
    v = jax.random.normal(kv, (B, Lk, Dv), dtype=jnp.float32)
    mask = jax.random.bernoulli(km, 0.2, (B, Lq, Lk))

    _check(q, k, v, temperature, None, "small/no-mask")
    _check(q, k, v, temperature, mask, "small/mask")

    # --- longer sequence (query-axis tiling path: TQ = 512, grid = (1, 2)) --
    B2, Lq2, Lk2, D2, Dv2 = 1, 1024, 256, 64, 64
    temperature2 = float(D2) ** 0.5
    q2 = jax.random.normal(kq2, (B2, Lq2, D2), dtype=jnp.float32)
    k2 = jax.random.normal(kk2, (B2, Lk2, D2), dtype=jnp.float32)
    v2 = jax.random.normal(kv2, (B2, Lk2, Dv2), dtype=jnp.float32)
    mask2 = jax.random.bernoulli(km2, 0.2, (B2, Lq2, Lk2))

    _check(q2, k2, v2, temperature2, None, "tiled/no-mask")
    _check(q2, k2, v2, temperature2, mask2, "tiled/mask")

    print("KERNEL_OK")
</pallas_src>

<mosaic_0001>
module attributes {stable_mosaic.version = 11 : i64} {
  func.func @_sdpa_kernel(%arg0: i32, %arg1: i32, %arg2: memref<2x8x32xf32, #tpu.memory_space<vmem>>, %arg3: memref<2x8x32xf32, #tpu.memory_space<vmem>>, %arg4: memref<2x8x32xf32, #tpu.memory_space<vmem>>, %arg5: memref<2x8x32xf32, #tpu.memory_space<vmem>>, %arg6: memref<2x8x8xf32, #tpu.memory_space<vmem>>) attributes {dimension_semantics = [#tpu.dimension_semantics<parallel>, #tpu.dimension_semantics<parallel>], iteration_bounds = array<i64: 1, 1>, scalar_prefetch = 0 : i64, scratch_operands = 0 : i64, tpu.core_type = #tpu.core_type<tc>, window_params = [{transform_indices = @transform_0, window_bounds = array<i64: 2, 8, 32>}, {transform_indices = @transform_1, window_bounds = array<i64: 2, 8, 32>}, {transform_indices = @transform_2, window_bounds = array<i64: 2, 8, 32>}, {transform_indices = @transform_3, window_bounds = array<i64: 2, 8, 32>}, {transform_indices = @transform_4, window_bounds = array<i64: 2, 8, 8>}]} {
    %c0 = arith.constant 0 : index
    %c0_0 = arith.constant 0 : index
    %c0_1 = arith.constant 0 : index
    %0 = vector.load %arg2[%c0, %c0_0, %c0_1] : memref<2x8x32xf32, #tpu.memory_space<vmem>>, vector<2x8x32xf32>
    %c0_2 = arith.constant 0 : index
    %c0_3 = arith.constant 0 : index
    %c0_4 = arith.constant 0 : index
    %1 = vector.load %arg3[%c0_2, %c0_3, %c0_4] : memref<2x8x32xf32, #tpu.memory_space<vmem>>, vector<2x8x32xf32>
    %c0_5 = arith.constant 0 : index
    %c0_6 = arith.constant 0 : index
    %c0_7 = arith.constant 0 : index
    %2 = vector.load %arg4[%c0_5, %c0_6, %c0_7] : memref<2x8x32xf32, #tpu.memory_space<vmem>>, vector<2x8x32xf32>
    %cst = arith.constant 0.176776692 : f32
    %3 = vector.broadcast %cst : f32 to vector<2x8x32xf32>
    %4 = arith.mulf %0, %3 : vector<2x8x32xf32>
    "tpu.trace_start"() <{level = 10 : i32, message = "bqd,bkd->bqk"}> : () -> ()
    %cst_8 = arith.constant dense<0.000000e+00> : vector<2x8x8xf32>
    %5 = tpu.matmul %4, %1, %cst_8 {dimension_numbers = #tpu.dot_dimension_numbers<[2], [2], [1], [1], [0, 0, 0, 1, 1, 1], [0], [0]>} : vector<2x8x32xf32>, vector<2x8x32xf32>, vector<2x8x8xf32> -> vector<2x8x8xf32>
    "tpu.trace_stop"() : () -> ()
    %cst_9 = arith.constant dense<0xFF800000> : vector<2x8xf32>
    %6 = vector.multi_reduction <maximumf>, %5, %cst_9 [2] : vector<2x8x8xf32> to vector<2x8xf32>
    %7 = vector.shape_cast %6 : vector<2x8xf32> to vector<2x8x1xf32>
    %8 = vector.broadcast %7 : vector<2x8x1xf32> to vector<2x8x8xf32>
    %9 = arith.subf %5, %8 : vector<2x8x8xf32>
    %10 = math.exp %9 : vector<2x8x8xf32>
    %cst_10 = arith.constant dense<0.000000e+00> : vector<2x8xf32>
    %11 = vector.multi_reduction <add>, %10, %cst_10 [2] : vector<2x8x8xf32> to vector<2x8xf32>
    %12 = vector.shape_cast %11 : vector<2x8xf32> to vector<2x8x1xf32>
    %13 = tpu.reciprocal %12 : vector<2x8x1xf32> -> vector<2x8x1xf32>
    %14 = vector.broadcast %13 : vector<2x8x1xf32> to vector<2x8x8xf32>
    %15 = arith.mulf %10, %14 : vector<2x8x8xf32>
    "tpu.trace_start"() <{level = 10 : i32, message = "bqk,bkd->bqd"}> : () -> ()
    %cst_11 = arith.constant dense<0.000000e+00> : vector<2x8x32xf32>
    %16 = tpu.matmul %15, %2, %cst_11 {dimension_numbers = #tpu.dot_dimension_numbers<[2], [1], [1], [2], [0, 0, 0, 1, 1, 2], [0], [0]>} : vector<2x8x8xf32>, vector<2x8x32xf32>, vector<2x8x32xf32> -> vector<2x8x32xf32>
    "tpu.trace_stop"() : () -> ()
    %c0_12 = arith.constant 0 : index
    %c0_13 = arith.constant 0 : index
    %c0_14 = arith.constant 0 : index
    %17 = vector.load %arg5[%c0_12, %c0_13, %c0_14] : memref<2x8x32xf32, #tpu.memory_space<vmem>>, vector<2x8x32xf32>
    tpu.vector_store %arg5[%c0_12, %c0_13, %c0_14], %16 {strides = array<i32>} : memref<2x8x32xf32, #tpu.memory_space<vmem>>, vector<2x8x32xf32>,
    %c0_15 = arith.constant 0 : index
    %c0_16 = arith.constant 0 : index
    %c0_17 = arith.constant 0 : index
    %18 = vector.load %arg6[%c0_15, %c0_16, %c0_17] : memref<2x8x8xf32, #tpu.memory_space<vmem>>, vector<2x8x8xf32>
    tpu.vector_store %arg6[%c0_15, %c0_16, %c0_17], %15 {strides = array<i32>} : memref<2x8x8xf32, #tpu.memory_space<vmem>>, vector<2x8x8xf32>,
    return
  }
  func.func @transform_0(%arg0: i32, %arg1: i32) -> (i32, i32, i32) {
    %c0_i32 = arith.constant 0 : i32
    %c0_i32_0 = arith.constant 0 : i32
    return %arg0, %arg1, %c0_i32 : i32, i32, i32
  }
  func.func @transform_1(%arg0: i32, %arg1: i32) -> (i32, i32, i32) {
    %c0_i32 = arith.constant 0 : i32
    %c0_i32_0 = arith.constant 0 : i32
    %c0_i32_1 = arith.constant 0 : i32
    return %arg0, %c0_i32, %c0_i32_0 : i32, i32, i32
  }
  func.func @transform_2(%arg0: i32, %arg1: i32) -> (i32, i32, i32) {
    %c0_i32 = arith.constant 0 : i32
    %c0_i32_0 = arith.constant 0 : i32
    %c0_i32_1 = arith.constant 0 : i32
    return %arg0, %c0_i32, %c0_i32_0 : i32, i32, i32
  }
  func.func @transform_3(%arg0: i32, %arg1: i32) -> (i32, i32, i32) {
    %c0_i32 = arith.constant 0 : i32
    %c0_i32_0 = arith.constant 0 : i32
    return %arg0, %arg1, %c0_i32 : i32, i32, i32
  }
  func.func @transform_4(%arg0: i32, %arg1: i32) -> (i32, i32, i32) {
    %c0_i32 = arith.constant 0 : i32
    %c0_i32_0 = arith.constant 0 : i32
    return %arg0, %arg1, %c0_i32 : i32, i32, i32
  }
}

</mosaic_0001>

<llo_original>
// kernel: tpu_custom_call.1
$region0: #{tpu_custom_call.1}
  #allocation0 [shape = 'u32[]', space=smem, size = 0x4, offset = 0x4, fixed_abs, tag = 'smem constant byte address 0x4 - core index']
  #allocation1 [shape = 'u32[144,128]{1,0:T(1,128)}', space=vmem, size = 0x12000, scoped, tag = 'internal scratch']
  %s0 = inlined_call_operand.hbm [shape: f32[2,8,32], index: 0, kind: input, shape index: {}]
  %s1 = inlined_call_operand.hbm [shape: f32[2,8,32], index: 1, kind: input, shape index: {}]
  %s2 = inlined_call_operand.hbm [shape: f32[2,8,32], index: 2, kind: input, shape index: {}]
  %s3 = inlined_call_operand.hbm [shape: f32[2,8,32], index: 3, kind: output, shape index: {0}]
  %s4 = inlined_call_operand.hbm [shape: f32[2,8,8], index: 4, kind: output, shape index: {1}]
  %5 = xla_tuple %s3, %s4
  %s6 = sld [smem:[#allocation0]]
  $region42: #{tpu_custom_call.1} parent=0
    _
  %s8 = ssub.s32 1, %s6
  %s9 = scalar_select 0, %s8, %s6
  $region1: #{tpu_custom_call.1} parent=0
    #allocation2 [shape = 'u8[8192]{0}', space=vmem, size = 0x2000, scoped, tag = 'input window, operand 0, single buffered']
    #allocation3 [shape = 's32[1]{0}', space=sflag, size = 0x4, scoped, tag = 'scoped memory for tpu_custom_call.1']
    #allocation4 [shape = 's32[1]{0}', space=sflag, size = 0x4, scoped, tag = 'scoped memory for tpu_custom_call.1']
    #allocation5 [shape = 'u8[8192]{0}', space=vmem, size = 0x2000, scoped, tag = 'input window, operand 1, single buffered']
    #allocation6 [shape = 's32[1]{0}', space=sflag, size = 0x4, scoped, tag = 'scoped memory for tpu_custom_call.1']
    #allocation7 [shape = 'u8[8192]{0}', space=vmem, size = 0x2000, scoped, tag = 'input window, operand 2, single buffered']
    #allocation8 [shape = 'u8[8192]{0}', space=vmem, size = 0x2000, scoped, tag = 'output window, operand 0, single buffered']
    #allocation9 [shape = 'u8[8192]{0}', space=vmem, size = 0x2000, scoped, tag = 'output window, operand 1, single buffered']
    #allocation10 [shape = 's32[1]{0}', space=sflag, size = 0x4, scoped, tag = 'scoped memory for tpu_custom_call.1']
    %10 = vsyncpa [#allocation3], 0
    %11 = vsyncpa [#allocation6], 0
    %12 = vsyncpa [#allocation4], 0
    %13 = vsyncpa [#allocation10], 0
    // Predicated region
    $region2: #{tpu_custom_call.1} parent=1 // pred_check
      _
    $region3: #{tpu_custom_call.1} parent=1 // pred_check_branch
      %15 = sbr.rel (0) target = $region5
    $region4: #{tpu_custom_call.1} parent=1 // pred_region
      %s17 = ssub.s32 256, 256
      %18 = vsyncadd [#allocation3], %s17
      %s19 = sshll.u32 [#allocation2], 4
      %s20 = int_to_ptr.vmem [resolvable:$true] %s19
      %25 = dma.hbm_to_vmem [thread:$0]  %s0, 256, %s20, [#allocation3], 128, 128, 8
    $region5: #{tpu_custom_call.1} parent=1 // pred_fallthru
      _
    // Predicated region
    $region6: #{tpu_custom_call.1} parent=1 // pred_check
      _
    $region7: #{tpu_custom_call.1} parent=1 // pred_check_branch
      %27 = sbr.rel (0) target = $region9
    $region8: #{tpu_custom_call.1} parent=1 // pred_region
      %s29 = ssub.s32 256, 256
      %30 = vsyncadd [#allocation6], %s29
      %s31 = sshll.u32 [#allocation5], 4
      %s32 = int_to_ptr.vmem [resolvable:$true] %s31
      %37 = dma.hbm_to_vmem [thread:$0]  %s1, 256, %s32, [#allocation6], 128, 128, 8
    $region9: #{tpu_custom_call.1} parent=1 // pred_fallthru
      _
    // Predicated region
    $region10: #{tpu_custom_call.1} parent=1 // pred_check
      _
    $region11: #{tpu_custom_call.1} parent=1 // pred_check_branch
      %39 = sbr.rel (0) target = $region13
    $region12: #{tpu_custom_call.1} parent=1 // pred_region
      %s41 = ssub.s32 256, 256
      %42 = vsyncadd [#allocation6], %s41
      %s43 = sshll.u32 [#allocation7], 4
      %s44 = int_to_ptr.vmem [resolvable:$true] %s43
      %49 = dma.hbm_to_vmem [thread:$0]  %s2, 256, %s44, [#allocation6], 128, 128, 8
    $region13: #{tpu_custom_call.1} parent=1 // pred_fallthru
      _
    // Predicated region
    $region14: #{tpu_custom_call.1} parent=1 // pred_check
      _
    $region15: #{tpu_custom_call.1} parent=1 // pred_check_branch
      %51 = sbr.rel (0) target = $region17
    $region16: #{tpu_custom_call.1} parent=1 // pred_region
      %52 = dma.done [#allocation3], 256
    $region17: #{tpu_custom_call.1} parent=1 // pred_fallthru
      _
    // Predicated region
    $region18: #{tpu_custom_call.1} parent=1 // pred_check
      _
    $region19: #{tpu_custom_call.1} parent=1 // pred_check_branch
      %54 = sbr.rel (0) target = $region21
    $region20: #{tpu_custom_call.1} parent=1 // pred_region
      %55 = dma.done [#allocation6], 256
    $region21: #{tpu_custom_call.1} parent=1 // pred_fallthru
      _
    // Predicated region
    $region22: #{tpu_custom_call.1} parent=1 // pred_check
      _
    $region23: #{tpu_custom_call.1} parent=1 // pred_check_branch
      %57 = sbr.rel (0) target = $region25
    $region24: #{tpu_custom_call.1} parent=1 // pred_region
      %58 = dma.done [#allocation6], 256
    $region25: #{tpu_custom_call.1} parent=1 // pred_fallthru
      _
    %v59 = vld [vmem:[#allocation2] sm:$0xff]
    %v60 = vld [vmem:[#allocation2 + $0x8] sm:$0xff]
    %v61 = vld [vmem:[#allocation5] sm:$0xff]
    %v62 = vld [vmem:[#allocation5 + $0x8] sm:$0xff]
    %v63 = vld [vmem:[#allocation7] sm:$0xff]
    %v64 = vld [vmem:[#allocation7 + $0x8] sm:$0xff]
    %v65 = vmul.f32 %v59, 0.17677669
    %v66 = vmul.f32 %v60, 0.17677669
    %vm67 = vcmask 261120
    %v69 = vsel %vm67, %v65, 0
    %v72 = vsel %vm67, %v61, 0
    %74 = vmatprep.subr.mxu0 0.0
    %75 = vmatpush1.xpose.msra.mxu0 %v72
    %76 = vmatprep.subr.mxu0 0.0
    %77 = vmatpush1.xpose.msra.mxu0 0.0
    %78 = vmatprep.subr.mxu0 0.0
    %79 = vmatpush1.xpose.msra.mxu0 0.0
    %80 = vmatprep.subr.mxu0 0.0
    %81 = vmatpush1.xpose.msra.mxu0 0.0
    %82 = vmatprep.subr.mxu0 0.0
    %83 = vmatpush1.xpose.msra.mxu0 0.0
    %84 = vmatprep.subr.mxu0 0.0
    %85 = vmatpush1.xpose.msra.mxu0 0.0
    %86 = vmatprep.subr.mxu0 0.0
    %87 = vmatpush1.xpose.msra.mxu0 0.0
    %88 = vmatprep.subr.mxu0 0.0
    %89 = vmatpush1.xpose.msra.mxu0 0.0
    %90 = vmatprep.subr.mxu0 0.0
    %91 = vmatpush1.xpose.msra.mxu0 0.0
    %92 = vmatprep.subr.mxu0 0.0
    %93 = vmatpush1.xpose.msra.mxu0 0.0
    %94 = vmatprep.subr.mxu0 0.0
    %95 = vmatpush1.xpose.msra.mxu0 0.0
    %96 = vmatprep.subr.mxu0 0.0
    %97 = vmatpush1.xpose.msra.mxu0 0.0
    %98 = vmatprep.subr.mxu0 0.0
    %99 = vmatpush1.xpose.msra.mxu0 0.0
    %100 = vmatprep.subr.mxu0 0.0
    %101 = vmatpush1.xpose.msra.mxu0 0.0
    %102 = vmatprep.subr.mxu0 0.0
    %103 = vmatpush1.xpose.msra.mxu0 0.0
    %104 = vmatprep.subr.mxu0 0.0
    %105 = vmatpush1.xpose.msra.mxu0 0.0
    %106 = vmatprep.subr.mxu0 0.0
    %107 = vmatpush1.xpose.msra.mxu0 0.0
    %108 = vmatprep.subr.mxu0 0.0
    %109 = vmatpush1.xpose.msra.mxu0 0.0
    %110 = vmatprep.subr.mxu0 0.0
    %111 = vmatpush1.xpose.msra.mxu0 0.0
    %112 = vmatprep.subr.mxu0 0.0
    %113 = vmatpush1.xpose.msra.mxu0 0.0
    %114 = vmatprep.subr.mxu0 0.0
    %115 = vmatpush1.xpose.msra.mxu0 0.0
    %116 = vmatprep.subr.mxu0 0.0
    %117 = vmatpush1.xpose.msra.mxu0 0.0
    %118 = vmatprep.subr.mxu0 0.0
    %119 = vmatpush1.xpose.msra.mxu0 0.0
    %120 = vmatprep.subr.mxu0 0.0
    %121 = vmatpush1.xpose.msra.mxu0 0.0
    %122 = vmatprep.subr.mxu0 0.0
    %123 = vmatpush1.xpose.msra.mxu0 0.0
    %124 = vmatprep.subr.mxu0 0.0
    %125 = vmatpush1.xpose.msra.mxu0 0.0
    %126 = vmatprep.subr.mxu0 0.0
    %127 = vmatpush1.xpose.msra.mxu0 0.0
    %128 = vmatprep.subr.mxu0 0.0
    %129 = vmatpush1.xpose.msra.mxu0 0.0
    %130 = vmatprep.subr.mxu0 0.0
    %131 = vmatpush1.xpose.msra.mxu0 0.0
    %132 = vmatprep.subr.mxu0 0.0
    %133 = vmatpush1.xpose.msra.mxu0 0.0
    %134 = vmatprep.subr.mxu0 0.0
    %135 = vmatpush1.xpose.msra.mxu0 0.0
    %136 = vmatprep.subr.mxu0 0.0
    %137 = vmatpush1.xpose.msra.mxu0 0.0
    %138 = vmatprep.mubr.f32.mxu0 0.0
    %139 = vmatmul.mubr.f32.gmra.mrb[0].mxu0 %v69
    %v140 = vpop.f32.mrb[0].mxu0
    %v141 = vadd.f32 0.0, %v140
    %v142 = vpop.f32.mrb[0].mxu0
    %143 = vdwg.mxu0
    %v145 = vsel %vm67, %v66, 0
    %v148 = vsel %vm67, %v62, 0
    %150 = vmatprep.subr.mxu0 0.0
    %151 = vmatpush1.xpose.msra.mxu0 %v148
    %152 = vmatprep.subr.mxu0 0.0
    %153 = vmatpush1.xpose.msra.mxu0 0.0
    %154 = vmatprep.subr.mxu0 0.0
    %155 = vmatpush1.xpose.msra.mxu0 0.0
    %156 = vmatprep.subr.mxu0 0.0
    %157 = vmatpush1.xpose.msra.mxu0 0.0
    %158 = vmatprep.subr.mxu0 0.0
    %159 = vmatpush1.xpose.msra.mxu0 0.0
    %160 = vmatprep.subr.mxu0 0.0
    %161 = vmatpush1.xpose.msra.mxu0 0.0
    %162 = vmatprep.subr.mxu0 0.0
    %163 = vmatpush1.xpose.msra.mxu0 0.0
    %164 = vmatprep.subr.mxu0 0.0
    %165 = vmatpush1.xpose.msra.mxu0 0.0
    %166 = vmatprep.subr.mxu0 0.0
    %167 = vmatpush1.xpose.msra.mxu0 0.0
    %168 = vmatprep.subr.mxu0 0.0
    %169 = vmatpush1.xpose.msra.mxu0 0.0
    %170 = vmatprep.subr.mxu0 0.0
    %171 = vmatpush1.xpose.msra.mxu0 0.0
    %172 = vmatprep.subr.mxu0 0.0
    %173 = vmatpush1.xpose.msra.mxu0 0.0
    %174 = vmatprep.subr.mxu0 0.0
    %175 = vmatpush1.xpose.msra.mxu0 0.0
    %176 = vmatprep.subr.mxu0 0.0
    %177 = vmatpush1.xpose.msra.mxu0 0.0
    %178 = vmatprep.subr.mxu0 0.0
    %179 = vmatpush1.xpose.msra.mxu0 0.0
    %180 = vmatprep.subr.mxu0 0.0
    %181 = vmatpush1.xpose.msra.mxu0 0.0
    %182 = vmatprep.subr.mxu0 0.0
    %183 = vmatpush1.xpose.msra.mxu0 0.0
    %184 = vmatprep.subr.mxu0 0.0
    %185 = vmatpush1.xpose.msra.mxu0 0.0
    %186 = vmatprep.subr.mxu0 0.0
    %187 = vmatpush1.xpose.msra.mxu0 0.0
    %188 = vmatprep.subr.mxu0 0.0
    %189 = vmatpush1.xpose.msra.mxu0 0.0
    %190 = vmatprep.subr.mxu0 0.0
    %191 = vmatpush1.xpose.msra.mxu0 0.0
    %192 = vmatprep.subr.mxu0 0.0
    %193 = vmatpush1.xpose.msra.mxu0 0.0
    %194 = vmatprep.subr.mxu0 0.0
    %195 = vmatpush1.xpose.msra.mxu0 0.0
    %196 = vmatprep.subr.mxu0 0.0
    %197 = vmatpush1.xpose.msra.mxu0 0.0
    %198 = vmatprep.subr.mxu0 0.0
    %199 = vmatpush1.xpose.msra.mxu0 0.0
    %200 = vmatprep.subr.mxu0 0.0
    %201 = vmatpush1.xpose.msra.mxu0 0.0
    %202 = vmatprep.subr.mxu0 0.0
    %203 = vmatpush1.xpose.msra.mxu0 0.0
    %204 = vmatprep.subr.mxu0 0.0
    %205 = vmatpush1.xpose.msra.mxu0 0.0
    %206 = vmatprep.subr.mxu0 0.0
    %207 = vmatpush1.xpose.msra.mxu0 0.0
    %208 = vmatprep.subr.mxu0 0.0
    %209 = vmatpush1.xpose.msra.mxu0 0.0
    %210 = vmatprep.subr.mxu0 0.0
    %211 = vmatpush1.xpose.msra.mxu0 0.0
    %212 = vmatprep.subr.mxu0 0.0
    %213 = vmatpush1.xpose.msra.mxu0 0.0
    %214 = vmatprep.mubr.f32.mxu0 0.0
    %215 = vmatmul.mubr.f32.gmra.mrb[0].mxu0 %v145
    %v216 = vpop.f32.mrb[0].mxu0
    %v217 = vadd.f32 0.0, %v216
    %v218 = vpop.f32.mrb[0].mxu0
    %219 = vdwg.mxu0
    %vm220 = vcmask 64512
    %v221 = vsel %vm220, %v141, -inf
    %222 = vmax.xlane.f32.xlu0 %v221
    %v223 = vpop.xlane.xlu0 %222
    %v224 = vsel %vm220, %v217, -inf
    %225 = vmax.xlane.f32.xlu0 %v224
    %v226 = vpop.xlane.xlu0 %225
    %v227 = vsub.f32 %v141, %v223
    %v228 = vsub.f32 %v217, %v226
    %v229 = vmul.f32 %v227, 1.442695
    %v230 = vpow.pop %v229
    %v231 = vmul.f32 %v228, 1.442695
    %v232 = vpow.pop %v231
    %v233 = vsel %vm220, %v230, 0.0
    %234 = vadd.xlane.f32.xlu0 %v233
    %v235 = vpop.xlane.xlu0 %234
    %v236 = vsel %vm220, %v232, 0.0
    %237 = vadd.xlane.f32.xlu0 %v236
    %v238 = vpop.xlane.xlu0 %237
    %v239 = vrcp.pop %v235
    %v240 = vrcp.pop %v238
    %v241 = vmul.f32 %v230, %v239
    %v242 = vmul.f32 %v232, %v240
    %v244 = vsel %vm220, %v241, 0
    %246 = vmatprep.subr.mxu0 0.0
    %247 = vmatpush1.msra.mxu0 %v63
    %248 = vmatprep.subr.mxu0 0.0
    %249 = vmatpush1.msra.mxu0 0.0
    %250 = vmatprep.subr.mxu0 0.0
    %251 = vmatpush1.msra.mxu0 0.0
    %252 = vmatprep.subr.mxu0 0.0
    %253 = vmatpush1.msra.mxu0 0.0
    %254 = vmatprep.subr.mxu0 0.0
    %255 = vmatpush1.msra.mxu0 0.0
    %256 = vmatprep.subr.mxu0 0.0
    %257 = vmatpush1.msra.mxu0 0.0
    %258 = vmatprep.subr.mxu0 0.0
    %259 = vmatpush1.msra.mxu0 0.0
    %260 = vmatprep.subr.mxu0 0.0
    %261 = vmatpush1.msra.mxu0 0.0
    %262 = vmatprep.subr.mxu0 0.0
    %263 = vmatpush1.msra.mxu0 0.0
    %264 = vmatprep.subr.mxu0 0.0
    %265 = vmatpush1.msra.mxu0 0.0
    %266 = vmatprep.subr.mxu0 0.0
    %267 = vmatpush1.msra.mxu0 0.0
    %268 = vmatprep.subr.mxu0 0.0
    %269 = vmatpush1.msra.mxu0 0.0
    %270 = vmatprep.subr.mxu0 0.0
    %271 = vmatpush1.msra.mxu0 0.0
    %272 = vmatprep.subr.mxu0 0.0
    %273 = vmatpush1.msra.mxu0 0.0
    %274 = vmatprep.subr.mxu0 0.0
    %275 = vmatpush1.msra.mxu0 0.0
    %276 = vmatprep.subr.mxu0 0.0
    %277 = vmatpush1.msra.mxu0 0.0
    %278 = vmatprep.subr.mxu0 0.0
    %279 = vmatpush1.msra.mxu0 0.0
    %280 = vmatprep.subr.mxu0 0.0
    %281 = vmatpush1.msra.mxu0 0.0
    %282 = vmatprep.subr.mxu0 0.0
    %283 = vmatpush1.msra.mxu0 0.0
    %284 = vmatprep.subr.mxu0 0.0
    %285 = vmatpush1.msra.mxu0 0.0
    %286 = vmatprep.subr.mxu0 0.0
    %287 = vmatpush1.msra.mxu0 0.0
    %288 = vmatprep.subr.mxu0 0.0
    %289 = vmatpush1.msra.mxu0 0.0
    %290 = vmatprep.subr.mxu0 0.0
    %291 = vmatpush1.msra.mxu0 0.0
    %292 = vmatprep.subr.mxu0 0.0
    %293 = vmatpush1.msra.mxu0 0.0
    %294 = vmatprep.subr.mxu0 0.0
    %295 = vmatpush1.msra.mxu0 0.0
    %296 = vmatprep.subr.mxu0 0.0
    %297 = vmatpush1.msra.mxu0 0.0
    %298 = vmatprep.subr.mxu0 0.0
    %299 = vmatpush1.msra.mxu0 0.0
    %300 = vmatprep.subr.mxu0 0.0
    %301 = vmatpush1.msra.mxu0 0.0
    %302 = vmatprep.subr.mxu0 0.0
    %303 = vmatpush1.msra.mxu0 0.0
    %304 = vmatprep.subr.mxu0 0.0
    %305 = vmatpush1.msra.mxu0 0.0
    %306 = vmatprep.subr.mxu0 0.0
    %307 = vmatpush1.msra.mxu0 0.0
    %308 = vmatprep.subr.mxu0 0.0
    %309 = vmatpush1.msra.mxu0 0.0
    %310 = vmatprep.mubr.f32.mxu0 0.0
    %311 = vmatmul.mubr.f32.gmra.mrb[0].mxu0 %v244
    %v312 = vpop.f32.mrb[0].mxu0
    %v313 = vadd.f32 0.0, %v312
    %v314 = vpop.f32.mrb[0].mxu0
    %315 = vdwg.mxu0
    %v317 = vsel %vm220, %v242, 0
    %319 = vmatprep.subr.mxu0 0.0
    %320 = vmatpush1.msra.mxu0 %v64
    %321 = vmatprep.subr.mxu0 0.0
    %322 = vmatpush1.msra.mxu0 0.0
    %323 = vmatprep.subr.mxu0 0.0
    %324 = vmatpush1.msra.mxu0 0.0
    %325 = vmatprep.subr.mxu0 0.0
    %326 = vmatpush1.msra.mxu0 0.0
    %327 = vmatprep.subr.mxu0 0.0
    %328 = vmatpush1.msra.mxu0 0.0
    %329 = vmatprep.subr.mxu0 0.0
    %330 = vmatpush1.msra.mxu0 0.0
    %331 = vmatprep.subr.mxu0 0.0
    %332 = vmatpush1.msra.mxu0 0.0
    %333 = vmatprep.subr.mxu0 0.0
    %334 = vmatpush1.msra.mxu0 0.0
    %335 = vmatprep.subr.mxu0 0.0
    %336 = vmatpush1.msra.mxu0 0.0
    %337 = vmatprep.subr.mxu0 0.0
    %338 = vmatpush1.msra.mxu0 0.0
    %339 = vmatprep.subr.mxu0 0.0
    %340 = vmatpush1.msra.mxu0 0.0
    %341 = vmatprep.subr.mxu0 0.0
    %342 = vmatpush1.msra.mxu0 0.0
    %343 = vmatprep.subr.mxu0 0.0
    %344 = vmatpush1.msra.mxu0 0.0
    %345 = vmatprep.subr.mxu0 0.0
    %346 = vmatpush1.msra.mxu0 0.0
    %347 = vmatprep.subr.mxu0 0.0
    %348 = vmatpush1.msra.mxu0 0.0
    %349 = vmatprep.subr.mxu0 0.0
    %350 = vmatpush1.msra.mxu0 0.0
    %351 = vmatprep.subr.mxu0 0.0
    %352 = vmatpush1.msra.mxu0 0.0
    %353 = vmatprep.subr.mxu0 0.0
    %354 = vmatpush1.msra.mxu0 0.0
    %355 = vmatprep.subr.mxu0 0.0
    %356 = vmatpush1.msra.mxu0 0.0
    %357 = vmatprep.subr.mxu0 0.0
    %358 = vmatpush1.msra.mxu0 0.0
    %359 = vmatprep.subr.mxu0 0.0
    %360 = vmatpush1.msra.mxu0 0.0
    %361 = vmatprep.subr.mxu0 0.0
    %362 = vmatpush1.msra.mxu0 0.0
    %363 = vmatprep.subr.mxu0 0.0
    %364 = vmatpush1.msra.mxu0 0.0
    %365 = vmatprep.subr.mxu0 0.0
    %366 = vmatpush1.msra.mxu0 0.0
    %367 = vmatprep.subr.mxu0 0.0
    %368 = vmatpush1.msra.mxu0 0.0
    %369 = vmatprep.subr.mxu0 0.0
    %370 = vmatpush1.msra.mxu0 0.0
    %371 = vmatprep.subr.mxu0 0.0
    %372 = vmatpush1.msra.mxu0 0.0
    %373 = vmatprep.subr.mxu0 0.0
    %374 = vmatpush1.msra.mxu0 0.0
    %375 = vmatprep.subr.mxu0 0.0
    %376 = vmatpush1.msra.mxu0 0.0
    %377 = vmatprep.subr.mxu0 0.0
    %378 = vmatpush1.msra.mxu0 0.0
    %379 = vmatprep.subr.mxu0 0.0
    %380 = vmatpush1.msra.mxu0 0.0
    %381 = vmatprep.subr.mxu0 0.0
    %382 = vmatpush1.msra.mxu0 0.0
    %383 = vmatprep.mubr.f32.mxu0 0.0
    %384 = vmatmul.mubr.f32.gmra.mrb[0].mxu0 %v317
    %v385 = vpop.f32.mrb[0].mxu0
    %v386 = vadd.f32 0.0, %v385
    %v387 = vpop.f32.mrb[0].mxu0
    %388 = vdwg.mxu0
    %389 = vst.msk [vmem:[#allocation8] sm:$0xff] %vm67, %v313
    %390 = vst.msk [vmem:[#allocation8 + $0x8] sm:$0xff] %vm67, %v386
    %391 = vst.msk [vmem:[#allocation9] sm:$0xff] %vm220, %v241
    %392 = vst.msk [vmem:[#allocation9 + $0x8] sm:$0xff] %vm220, %v242
    // Predicated region
    $region26: #{tpu_custom_call.1} parent=1 // pred_check
      _
    $region27: #{tpu_custom_call.1} parent=1 // pred_check_branch
      %394 = sbr.rel (0) target = $region29
    $region28: #{tpu_custom_call.1} parent=1 // pred_region
      %s396 = ssub.s32 256, 256
      %397 = vsyncadd [#allocation4], %s396
      %s398 = sshll.u32 [#allocation8], 4
      %s399 = int_to_ptr.vmem [resolvable:$true] %s398
      %404 = dma.vmem_to_hbm [thread:$0]  %s399, 256, %s3, [#allocation4], 128, 128, 8
    $region29: #{tpu_custom_call.1} parent=1 // pred_fallthru
      _
    // Predicated region
    $region30: #{tpu_custom_call.1} parent=1 // pred_check
      _
    $region31: #{tpu_custom_call.1} parent=1 // pred_check_branch
      %406 = sbr.rel (0) target = $region33
    $region32: #{tpu_custom_call.1} parent=1 // pred_region
      %s408 = ssub.s32 256, 256
      %409 = vsyncadd [#allocation10], %s408
      %s410 = sshll.u32 [#allocation9], 4
      %s411 = int_to_ptr.vmem [resolvable:$true] %s410
      %416 = dma.vmem_to_hbm [thread:$0]  %s411, 256, %s4, [#allocation10], 128, 128, 8
    $region33: #{tpu_custom_call.1} parent=1 // pred_fallthru
      _
    // Predicated region
    $region34: #{tpu_custom_call.1} parent=1 // pred_check
      _
    $region35: #{tpu_custom_call.1} parent=1 // pred_check_branch
      %418 = sbr.rel (0) target = $region37
    $region36: #{tpu_custom_call.1} parent=1 // pred_region
      %419 = dma.done [#allocation4], 256
    $region37: #{tpu_custom_call.1} parent=1 // pred_fallthru
      _
    // Predicated region
    $region38: #{tpu_custom_call.1} parent=1 // pred_check
      _
    $region39: #{tpu_custom_call.1} parent=1 // pred_check_branch
      %421 = sbr.rel (0) target = $region41
    $region40: #{tpu_custom_call.1} parent=1 // pred_region
      %422 = dma.done [#allocation10], 256
    $region41: #{tpu_custom_call.1} parent=1 // pred_fallthru
      _
    %423 = vsyncpa [#allocation3], 1
    %424 = vsyncpa [#allocation6], 1
    %425 = vsyncpa [#allocation4], 1
    %426 = vsyncpa [#allocation10], 1

</llo_original>
